<compile_context>
chip_gen: v5e
topology: v5e:2x2
jax: 0.10.0
libtpu: 0.0.40
codegen_flags: <defaults>
</compile_context>

<pallas_src>
import functools

import jax
import jax.numpy as jnp
from jax.experimental import pallas as pl
from jax.experimental.pallas import tpu as pltpu


_LANE = 128
_MIN_TILE_LANES = 512    # below ~512 lanes per step, overhead dominates (~29% vs ~85% of HBM roofline)
_MAX_TILE_LANES = 4096   # beyond ~4k lanes there is no further DMA-efficiency gain; VMEM just grows


def _round_up(x, m):
    return ((x + m - 1) // m) * m


@functools.lru_cache(maxsize=None)
def _hw_params():
    """(per-step VMEM budget, vmem_limit_bytes, num TensorCores) for this chip."""
    vmem_capacity = 64 * 1024 * 1024   # conservative default (v7x per-TC VMEM)
    num_cores = 2
    try:
        info = pltpu.get_tpu_info()
        vmem_capacity = int(getattr(info, "vmem_capacity_bytes", vmem_capacity))
        for attr in ("num_cores", "core_count", "num_tensorcores"):
            v = getattr(info, attr, None)
            if v:
                num_cores = int(v)
                break
    except Exception:
        pass  # interpret mode / query unavailable: keep safe defaults
    num_cores = max(1, num_cores)
    # ~80 MiB limit on 128 MiB parts (v5e/v6e), ~40 MiB on 64 MiB parts (v7x).
    vmem_limit = min((vmem_capacity * 5) // 8, 96 * 1024 * 1024)
    step_budget = vmem_limit // 3      # ~30% headroom over the block estimate
    return step_budget, vmem_limit, num_cores


def _block_bytes_per_col(n, itemsize):
    # 2x double-buffered input + 2x double-buffered output blocks (I/O dtype)
    # + ~3 live f32 intermediates per element.
    return n * (4 * itemsize + 12)


def _choose_tile_d(n, d, itemsize, budget, num_cores):
    """Lane-tile width for the single-pass kernel, or None when even an
    (N, 128) block exceeds the per-step budget (-> two-pass N-chunked path)."""
    d_ceil = _round_up(d, _LANE)
    per_col = _block_bytes_per_col(n, itemsize)
    max_tile = (budget // per_col) // _LANE * _LANE
    if max_tile < _LANE:
        return None
    min_steps = max(4, 2 * num_cores)
    # Tiny feature dim: one exact-D block -> full-dim (unmasked) store, no
    # pad, no per-step overhead (covers the 8x256 test case).
    if (d_ceil <= max_tile and d_ceil <= _MAX_TILE_LANES
            and d_ceil < min_steps * _MIN_TILE_LANES):
        return d
    tile = min(max_tile, _MAX_TILE_LANES, d_ceil)
    # Prefer >= min_steps (even) grid steps so double-buffering overlaps DMA
    # and multi-TC chips stay balanced, while keeping tiles >= 512 lanes.
    if pl.cdiv(d_ceil, tile) < min_steps:
        tile = max(_MIN_TILE_LANES, (d_ceil // min_steps) // _LANE * _LANE)
        tile = min(tile, max_tile, d_ceil)
    return max(tile, _LANE)


def _choose_two_pass_tiles(n, d, itemsize, budget):
    d_ceil = _round_up(d, _LANE)
    tile_d = min(_MIN_TILE_LANES, d_ceil)
    per_elem = 4 * itemsize + 12
    tile_n = max(8, (budget // (tile_d * per_elem)) // 8 * 8)
    tile_n = min(tile_n, _round_up(n, 8))
    return tile_n, tile_d


# --------------------------- single-pass kernel -----------------------------

def _softmax_dim0_kernel(x_ref, o_ref):
    # x_ref / o_ref: (N, TILE_D) VMEM tiles; reduce over sublanes (axis 0).
    # Lanes (columns) are independent, so garbage in OOB lanes of a ragged
    # last tile stays confined there and is never stored (masked writeback).
    x = x_ref[...].astype(jnp.float32)            # f32 compute (v5e: no bf16 VPU/EUP)
    x_exp = jnp.exp(x)                            # EUP transcendental
    sum_exp = x_exp.sum(axis=0, keepdims=True)    # XLU sublane reduction -> (1, TILE_D)
    inv = pl.reciprocal(sum_exp, approx=False)    # exact: holds 1e-6 parity with torch
    o_ref[...] = (x_exp * inv).astype(o_ref.dtype)


# ------------------------ two-pass (large-N) kernels ------------------------

def _colsum_kernel(x_ref, sum_ref, *, n_total, tile_n):
    # Accumulate per-column sum(exp(x)) over N chunks; sum_ref (1, TILE_D) is
    # resident across the (last, 'arbitrary') N grid axis.
    k = pl.program_id(1)

    @pl.when(k == 0)
    def _():
        sum_ref[...] = jnp.zeros_like(sum_ref)

    e = jnp.exp(x_ref[...].astype(jnp.float32))
    row = k * tile_n + jax.lax.broadcasted_iota(jnp.int32, e.shape, 0)
    e = jnp.where(row < n_total, e, 0.0)          # mask OOB rows of last N chunk
    sum_ref[...] += e.sum(axis=0, keepdims=True)


def _normalize_kernel(x_ref, sum_ref, o_ref):
    e = jnp.exp(x_ref[...].astype(jnp.float32))
    inv = pl.reciprocal(sum_ref[...], approx=False)
    o_ref[...] = (e * inv).astype(o_ref.dtype)


def _softmax_two_pass(x2, tile_n, tile_d, vmem_limit):
    """Large-N path: pass 1 accumulates per-column sum(exp(x)) over N chunks,
    pass 2 re-reads x and normalizes. Block footprint is independent of N."""
    n, d = x2.shape
    d_steps = pl.cdiv(d, tile_d)
    n_steps = pl.cdiv(n, tile_n)

    sums = pl.pallas_call(
        functools.partial(_colsum_kernel, n_total=n, tile_n=tile_n),
        out_shape=jax.ShapeDtypeStruct((1, d), jnp.float32),
        grid_spec=pltpu.PrefetchScalarGridSpec(
            num_scalar_prefetch=0,
            grid=(d_steps, n_steps),              # reduction (N) axis last
            in_specs=[pl.BlockSpec((tile_n, tile_d), lambda j, k: (k, j))],
            out_specs=pl.BlockSpec((1, tile_d), lambda j, k: (0, j)),
        ),
        compiler_params=pltpu.CompilerParams(
            dimension_semantics=("parallel", "arbitrary"),
            vmem_limit_bytes=vmem_limit,
        ),
    )(x2)

    return pl.pallas_call(
        _normalize_kernel,
        out_shape=jax.ShapeDtypeStruct((n, d), x2.dtype),
        grid_spec=pltpu.PrefetchScalarGridSpec(
            num_scalar_prefetch=0,
            grid=(d_steps, n_steps),
            in_specs=[pl.BlockSpec((tile_n, tile_d), lambda j, k: (k, j)),
                      pl.BlockSpec((1, tile_d), lambda j, k: (0, j))],
            out_specs=pl.BlockSpec((tile_n, tile_d), lambda j, k: (k, j)),
        ),
        compiler_params=pltpu.CompilerParams(
            dimension_semantics=("parallel", "parallel"),
            vmem_limit_bytes=vmem_limit,
        ),
    )(x2, sums)


# --------------------------------- wrapper ----------------------------------

def my_softmax(x):
    """exp(x) / sum(exp(x), axis=0, keepdims=True) — matches MySoftmax exactly.
    Note: no max-subtraction (by spec), so exp overflows f32 for x > ~88."""
    orig_shape = x.shape
    n = orig_shape[0]
    d = 1
    for s in orig_shape[1:]:
        d *= s
    if n == 0 or d == 0:
        return x  # no elements: shape-preserving no-op
    x2 = x.reshape(n, d)

    itemsize = jnp.dtype(x.dtype).itemsize
    budget, vmem_limit, num_cores = _hw_params()
    tile_d = _choose_tile_d(n, d, itemsize, budget, num_cores)

    if tile_d is None:
        # N too long for a full-column block: two-pass, N-chunked accumulator.
        tile_n, tile_d2 = _choose_two_pass_tiles(n, d, itemsize, budget)
        out2 = _softmax_two_pass(x2, tile_n, tile_d2, vmem_limit)
    else:
        grid = (pl.cdiv(d, tile_d),)   # ragged: only the last lane tile is masked
        out2 = pl.pallas_call(
            _softmax_dim0_kernel,
            out_shape=jax.ShapeDtypeStruct((n, d), x.dtype),
            grid_spec=pltpu.PrefetchScalarGridSpec(
                num_scalar_prefetch=0,
                grid=grid,
                in_specs=[pl.BlockSpec((n, tile_d), lambda j: (0, j))],
                out_specs=pl.BlockSpec((n, tile_d), lambda j: (0, j)),
            ),
            compiler_params=pltpu.CompilerParams(
                dimension_semantics=("parallel",),
                vmem_limit_bytes=vmem_limit,
            ),
        )(x2)

    return out2.reshape(orig_shape)


if __name__ == "__main__":
    key = jax.random.PRNGKey(0)

    # Small input consistent with the module: seq=8 (softmax axis), hidden=256.
    x = jax.random.normal(key, (8, 256), dtype=jnp.float32)
    out = jax.block_until_ready(my_softmax(x))
    x_exp = jnp.exp(x)
    ref = x_exp / x_exp.sum(axis=0, keepdims=True)
    assert out.shape == x.shape and out.dtype == x.dtype
    assert jnp.allclose(out, ref, atol=1e-6, rtol=1e-6)

    # Multi-dim trailing axes with a non-128-multiple flattened width:
    # exercises the ragged (masked) last lane tile of the single-pass path.
    k1, k2 = jax.random.split(key)
    x_ragged = jax.random.normal(k1, (8, 3, 700), dtype=jnp.float32)
    out_ragged = jax.block_until_ready(my_softmax(x_ragged))
    e = jnp.exp(x_ragged)
    ref_ragged = e / e.sum(axis=0, keepdims=True)
    assert out_ragged.shape == x_ragged.shape
    assert jnp.allclose(out_ragged, ref_ragged, atol=1e-6, rtol=1e-6)

    # Validate the large-N two-pass path directly with small forced tiles
    # (ragged in both N and D so the row masking + masked stores are hit).
    x_big_n = jax.random.normal(k2, (40, 300), dtype=jnp.float32)
    _, _vmem_limit, _ = _hw_params()
    out_2p = jax.block_until_ready(
        _softmax_two_pass(x_big_n, tile_n=16, tile_d=128, vmem_limit=_vmem_limit))
    e2 = jnp.exp(x_big_n)
    ref_2p = e2 / e2.sum(axis=0, keepdims=True)
    assert jnp.allclose(out_2p, ref_2p, atol=1e-6, rtol=1e-6)

    print("KERNEL_OK")
</pallas_src>

<mosaic_0001>
module attributes {stable_mosaic.version = 11 : i64} {
  func.func @_softmax_dim0_kernel(%arg0: i32, %arg1: memref<8x256xf32, #tpu.memory_space<vmem>>, %arg2: memref<8x256xf32, #tpu.memory_space<vmem>>) attributes {dimension_semantics = [#tpu.dimension_semantics<parallel>], iteration_bounds = array<i64: 1>, scalar_prefetch = 0 : i64, scratch_operands = 0 : i64, tpu.core_type = #tpu.core_type<tc>, window_params = [{transform_indices = @transform_0, window_bounds = array<i64: 8, 256>}, {transform_indices = @transform_1, window_bounds = array<i64: 8, 256>}]} {
    %c0 = arith.constant 0 : index
    %c0_0 = arith.constant 0 : index
    %0 = vector.load %arg1[%c0, %c0_0] : memref<8x256xf32, #tpu.memory_space<vmem>>, vector<8x256xf32>
    %1 = math.exp %0 : vector<8x256xf32>
    %cst = arith.constant dense<0.000000e+00> : vector<256xf32>
    %2 = vector.multi_reduction <add>, %1, %cst [0] : vector<8x256xf32> to vector<256xf32>
    %3 = vector.shape_cast %2 : vector<256xf32> to vector<1x256xf32>
    %4 = tpu.reciprocal %3 : vector<1x256xf32> -> vector<1x256xf32>
    %5 = vector.broadcast %4 : vector<1x256xf32> to vector<8x256xf32>
    %6 = arith.mulf %1, %5 : vector<8x256xf32>
    %c0_1 = arith.constant 0 : index
    %c0_2 = arith.constant 0 : index
    %7 = vector.load %arg2[%c0_1, %c0_2] : memref<8x256xf32, #tpu.memory_space<vmem>>, vector<8x256xf32>
    tpu.vector_store %arg2[%c0_1, %c0_2], %6 {strides = array<i32>} : memref<8x256xf32, #tpu.memory_space<vmem>>, vector<8x256xf32>,
    return
  }
  func.func @transform_0(%arg0: i32) -> (i32, i32) {
    %c0_i32 = arith.constant 0 : i32
    %c0_i32_0 = arith.constant 0 : i32
    return %c0_i32, %arg0 : i32, i32
  }
  func.func @transform_1(%arg0: i32) -> (i32, i32) {
    %c0_i32 = arith.constant 0 : i32
    %c0_i32_0 = arith.constant 0 : i32
    return %c0_i32, %arg0 : i32, i32
  }
}

</mosaic_0001>

<llo_original>
// kernel: tpu_custom_call.1
$region0: #{tpu_custom_call.1}
  #allocation0 [shape = 'u32[]', space=smem, size = 0x4, offset = 0x4, fixed_abs, tag = 'smem constant byte address 0x4 - core index']
  #allocation1 [shape = 'u32[72,128]{1,0:T(1,128)}', space=vmem, size = 0x9000, scoped, tag = 'internal scratch']
  %s0 = inlined_call_operand.hbm [shape: f32[8,256], index: 0, kind: input, shape index: {}]
  %s1 = inlined_call_operand.hbm [shape: f32[8,256], index: 1, kind: output, shape index: {}]
  %s2 = sld [smem:[#allocation0]]
  $region18: #{tpu_custom_call.1} parent=0
    _
  %s4 = ssub.s32 1, %s2
  %s5 = scalar_select 0, %s4, %s2
  $region1: #{tpu_custom_call.1} parent=0
    #allocation2 [shape = 'u8[8192]{0}', space=vmem, size = 0x2000, scoped, tag = 'input window, operand 0, single buffered']
    #allocation3 [shape = 's32[1]{0}', space=sflag, size = 0x4, scoped, tag = 'scoped memory for tpu_custom_call.1']
    #allocation4 [shape = 's32[1]{0}', space=sflag, size = 0x4, scoped, tag = 'scoped memory for tpu_custom_call.1']
    #allocation5 [shape = 'u8[8192]{0}', space=vmem, size = 0x2000, scoped, tag = 'output window, operand 0, single buffered']
    %6 = vsyncpa [#allocation3], 0
    %7 = vsyncpa [#allocation4], 0
    // Predicated region
    $region2: #{tpu_custom_call.1} parent=1 // pred_check
      _
    $region3: #{tpu_custom_call.1} parent=1 // pred_check_branch
      %9 = sbr.rel (0) target = $region5
    $region4: #{tpu_custom_call.1} parent=1 // pred_region
      %11 = vsyncadd [#allocation3], 0
      %s13 = sshll.u32 %s0, 4
      %s14 = int_to_ptr.hbm [resolvable:$true] %s13
      %s15 = sshll.u32 [#allocation2], 4
      %s16 = int_to_ptr.vmem [resolvable:$true] %s15
      %18 = dma.hbm_to_vmem [thread:$0]  %s14, 256, %s16, [#allocation3]
    $region5: #{tpu_custom_call.1} parent=1 // pred_fallthru
      _
    // Predicated region
    $region6: #{tpu_custom_call.1} parent=1 // pred_check
      _
    $region7: #{tpu_custom_call.1} parent=1 // pred_check_branch
      %20 = sbr.rel (0) target = $region9
    $region8: #{tpu_custom_call.1} parent=1 // pred_region
      %22 = dma.done [#allocation3], 256
    $region9: #{tpu_custom_call.1} parent=1 // pred_fallthru
      _
    %v23 = vld [vmem:[#allocation2] sm:$0xff]
    %v24 = vld [vmem:[#allocation2 + $0x8] sm:$0xff]
    %v25 = vmul.f32 %v23, 1.442695
    %v26 = vpow.pop %v25
    %v27 = vmul.f32 %v24, 1.442695
    %v28 = vpow.pop %v27
    %v29 = vrot.slane %v26, 4
    %v30 = vadd.f32 %v26, %v29
    %v31 = vrot.slane %v30, 2
    %v32 = vadd.f32 %v30, %v31
    %v33 = vrot.slane %v32, 1
    %v34 = vadd.f32 %v32, %v33
    %v35 = vrot.slane %v28, 4
    %v36 = vadd.f32 %v28, %v35
    %v37 = vrot.slane %v36, 2
    %v38 = vadd.f32 %v36, %v37
    %v39 = vrot.slane %v38, 1
    %v40 = vadd.f32 %v38, %v39
    %v41 = vrcp.pop %v34
    %v42 = vmul.f32 %v34, %v41
    %v43 = vsub.f32 1.0, %v42
    %v44 = vmul.f32 %v41, %v43
    %v45 = vadd.f32 %v41, %v44
    %vm46 = vweird.f32 %v34
    %vm47 = vweird.f32 %v41
    %vm48 = vmor %vm46, %vm47
    %v49 = vsel %vm48, %v41, %v45
    %v50 = vand.u32 2147483647, %v34
    %vm51 = vcmp.eq.f32.partialorder %v50, 8.507059e+37
    %v52 = vand.u32 %v34, 2147483648
    %v53 = vor.u32 1.1754944e-38, %v52
    %v54 = vsel %vm51, %v53, %v49
    %v55 = vrcp.pop %v40
    %v56 = vmul.f32 %v40, %v55
    %v57 = vsub.f32 1.0, %v56
    %v58 = vmul.f32 %v55, %v57
    %v59 = vadd.f32 %v55, %v58
    %vm60 = vweird.f32 %v40
    %vm61 = vweird.f32 %v55
    %vm62 = vmor %vm60, %vm61
    %v63 = vsel %vm62, %v55, %v59
    %v64 = vand.u32 2147483647, %v40
    %vm65 = vcmp.eq.f32.partialorder %v64, 8.507059e+37
    %v66 = vand.u32 %v40, 2147483648
    %v67 = vor.u32 1.1754944e-38, %v66
    %v68 = vsel %vm65, %v67, %v63
    %v69 = vmul.f32 %v26, %v54
    %v70 = vmul.f32 %v28, %v68
    %71 = vst [vmem:[#allocation5] sm:$0xff] %v69
    %72 = vst [vmem:[#allocation5 + $0x8] sm:$0xff] %v70
    // Predicated region
    $region10: #{tpu_custom_call.1} parent=1 // pred_check
      _
    $region11: #{tpu_custom_call.1} parent=1 // pred_check_branch
      %74 = sbr.rel (0) target = $region13
    $region12: #{tpu_custom_call.1} parent=1 // pred_region
      %76 = vsyncadd [#allocation4], 0
      %s78 = sshll.u32 [#allocation5], 4
      %s79 = int_to_ptr.vmem [resolvable:$true] %s78
      %s80 = sshll.u32 %s1, 4
      %s81 = int_to_ptr.hbm [resolvable:$true] %s80
      %83 = dma.vmem_to_hbm [thread:$0]  %s79, 256, %s81, [#allocation4]
    $region13: #{tpu_custom_call.1} parent=1 // pred_fallthru
      _
    // Predicated region
    $region14: #{tpu_custom_call.1} parent=1 // pred_check
      _
    $region15: #{tpu_custom_call.1} parent=1 // pred_check_branch
      %85 = sbr.rel (0) target = $region17
    $region16: #{tpu_custom_call.1} parent=1 // pred_region
      %87 = dma.done [#allocation4], 256
    $region17: #{tpu_custom_call.1} parent=1 // pred_fallthru
      _
    %88 = vsyncpa [#allocation3], 1
    %89 = vsyncpa [#allocation4], 1

</llo_original>
